<compile_context>
chip_gen: v7x
topology: tpu7x:2x2x1
jax: 0.10.0
libtpu: 0.0.40
codegen_flags: <defaults>
</compile_context>

<pallas_src>
import functools

import jax
import jax.numpy as jnp
from jax.experimental import pallas as pl
from jax.experimental.pallas import tpu as pltpu


DEFAULT_VMEM_BUDGET = 14 * 1024 * 1024  # conservative vs v5e's 16 MiB default scoped VMEM


# --------------------------------------------------------------------------------------
# Fast path: whole problem comfortably fits VMEM -> single block, no grid.
# --------------------------------------------------------------------------------------
def _small_matvec_kernel(x_ref, m_ref, o_ref):
    o_ref[...] = jnp.dot(
        x_ref[...], m_ref[...], preferred_element_type=jnp.float32
    ).astype(o_ref.dtype)


def symmetric_matvec_small(x_c, m_c, out_dtype):
    B, N = x_c.shape
    return pl.pallas_call(
        _small_matvec_kernel,
        out_shape=jax.ShapeDtypeStruct((B, N), out_dtype),
    )(x_c, m_c)


# --------------------------------------------------------------------------------------
# Tiled, symmetry-exploiting path.
# Grid = (num_cores, steps_per_core) over the upper-triangular block-pair schedule.
# --------------------------------------------------------------------------------------
def _sym_tiled_kernel(bi_ref, bj_ref, x_ref, xt_ref, m_ref, o_ref, ot_ref,
                      *, steps_per_core):
    # bi_ref/bj_ref : SMEM (n_steps_total,) upper-triangular block-pair schedule
    # x_ref  : (nb, B, T)  x, VMEM-resident (constant block index -> DMA'd once)
    # xt_ref : (nb, T, B)  per-block transposed x, VMEM-resident
    # m_ref  : (T, T)      packed upper-triangular tile M[bi, bj], bi <= bj
    # o_ref  : (nb, B, T)  f32 accumulator: "direct" contributions  x[bi] @ M
    # ot_ref : (nb, T, B)  f32 accumulator: "mirrored" contributions M @ x[bj].T
    c = pl.program_id(0)
    s = pl.program_id(1)

    @pl.when(s == 0)
    def _():
        o_ref[...] = jnp.zeros_like(o_ref)
        ot_ref[...] = jnp.zeros_like(ot_ref)

    t = c * steps_per_core + s
    bi = bi_ref[t]
    bj = bj_ref[t]
    m_tile = m_ref[...]

    # y[:, bj-block] += x[:, bi-block] @ M[bi, bj]
    o_ref[bj] += jnp.dot(x_ref[bi], m_tile, preferred_element_type=jnp.float32)

    # Off-diagonal tile reused "transposed" (M symmetric) WITHOUT transposing the
    # (T, T) tile: accumulate  M[bi, bj] @ x[:, bj-block].T  (a (T, B) slab); the
    # wrapper folds it in as (M @ x.T).T == x @ M.T.
    @pl.when(bi != bj)
    def _():
        ot_ref[bi] += jnp.dot(m_tile, xt_ref[bj], preferred_element_type=jnp.float32)


def pack_symmetric_tiles(m, block, compute_dtype, num_cores=1, assume_symmetric=False):
    """One-time repack of the upper-triangular (T, T) tiles of symmetric M into a
    contiguous (n_steps, T, T) stack plus the (bi, bj) schedule (scalar-prefetched)."""
    m = jnp.asarray(m)
    N = m.shape[0]
    assert m.shape == (N, N)
    assert N % block == 0 and block % 128 == 0, "tiled path needs N % block == 0, block % 128 == 0"
    if not assume_symmetric:
        m = 0.5 * (m + m.T)  # tiled path only ever reads the upper triangle

    nb = N // block
    pairs = [(i, j) for i in range(nb) for j in range(i, nb)]
    steps_per_core = -(-len(pairs) // num_cores)
    n_total = steps_per_core * num_cores

    tiles = [m[i * block:(i + 1) * block, j * block:(j + 1) * block] for i, j in pairs]
    # Pad the schedule with zero tiles on the (0, 0) diagonal slot (contributes nothing).
    n_pad = n_total - len(pairs)
    tiles += [jnp.zeros((block, block), m.dtype)] * n_pad
    pairs += [(0, 0)] * n_pad

    m_tiles = jnp.stack(tiles).astype(compute_dtype)
    bi = jnp.asarray([p[0] for p in pairs], dtype=jnp.int32)
    bj = jnp.asarray([p[1] for p in pairs], dtype=jnp.int32)
    return m_tiles, bi, bj, steps_per_core


def _m_tile_spec(block, steps_per_core, n_buffers):
    index_map = lambda c, s, bi, bj: (c * steps_per_core + s, 0, 0)
    if n_buffers != 2 and hasattr(pl, "Buffered"):
        try:
            return pl.BlockSpec((None, block, block), index_map,
                                pipeline_mode=pl.Buffered(n_buffers))
        except TypeError:
            pass  # older BlockSpec without pipeline_mode: plain double-buffering
    return pl.BlockSpec((None, block, block), index_map)


def _tiled_vmem_bytes(n, batch, block, compute_itemsize, m_buffers):
    m_bytes = m_buffers * block * block * compute_itemsize       # pipelined M tiles
    x_bytes = 2 * 2 * batch * n * compute_itemsize               # x + x^T (resident)
    acc_bytes = 2 * 2 * batch * n * 4                            # two f32 accumulators
    return m_bytes + x_bytes + acc_bytes


def _pick_block(n, batch, compute_itemsize, m_buffers, budget):
    candidates = [t for t in (1024, 512, 256, 128) if n % t == 0]
    if not candidates:
        raise ValueError("tiled symmetric matvec needs N to be a multiple of 128")
    for t in candidates:
        if _tiled_vmem_bytes(n, batch, t, compute_itemsize, m_buffers) <= budget:
            return t
    return candidates[-1]


def symmetric_matvec_tiled(x, m_tiles, bi_idx, bj_idx, *, n, block, num_cores,
                           steps_per_core, m_buffers=2, out_dtype=None,
                           vmem_budget=DEFAULT_VMEM_BUDGET):
    """y = x @ M with M given as packed upper-triangular tiles (see pack_symmetric_tiles)."""
    B = x.shape[0]
    out_dtype = out_dtype if out_dtype is not None else x.dtype
    cdt = m_tiles.dtype
    nb = n // block

    x_c = x.astype(cdt)
    x_blk = x_c.reshape(B, nb, block).swapaxes(0, 1)   # (nb, B, T)
    xt_blk = x_blk.swapaxes(1, 2)                      # (nb, T, B)

    est = _tiled_vmem_bytes(n, B, block, jnp.dtype(cdt).itemsize, m_buffers)
    vmem_limit = min(int(est) + (2 << 20), 64 << 20) if est > vmem_budget else None

    kernel = functools.partial(_sym_tiled_kernel, steps_per_core=steps_per_core)

    out, out_t = pl.pallas_call(
        kernel,
        out_shape=(
            jax.ShapeDtypeStruct((num_cores, nb, B, block), jnp.float32),
            jax.ShapeDtypeStruct((num_cores, nb, block, B), jnp.float32),
        ),
        grid_spec=pltpu.PrefetchScalarGridSpec(
            num_scalar_prefetch=2,
            grid=(num_cores, steps_per_core),
            in_specs=[
                # x blocks: tiny, fully VMEM-resident (constant block index).
                pl.BlockSpec((nb, B, block), lambda c, s, bi, bj: (0, 0, 0)),
                pl.BlockSpec((nb, block, B), lambda c, s, bi, bj: (0, 0, 0)),
                # M: one contiguous pre-packed upper-triangular tile per step.
                _m_tile_spec(block, steps_per_core, m_buffers),
            ],
            out_specs=(
                # Per-core accumulators: constant block index across the reduction
                # axis -> VMEM-resident, written back once per core.
                pl.BlockSpec((None, nb, B, block), lambda c, s, bi, bj: (c, 0, 0, 0)),
                pl.BlockSpec((None, nb, block, B), lambda c, s, bi, bj: (c, 0, 0, 0)),
            ),
        ),
        compiler_params=pltpu.CompilerParams(
            dimension_semantics=("parallel", "arbitrary"),
            vmem_limit_bytes=vmem_limit,
        ),
    )(bi_idx, bj_idx, x_blk, xt_blk, m_tiles)

    # Combine per-core partials and fold the transposed (mirrored) accumulator in.
    y = out.sum(axis=0) + out_t.sum(axis=0).transpose(0, 2, 1)   # (nb, B, T)
    return y.swapaxes(0, 1).reshape(B, n).astype(out_dtype)


# --------------------------------------------------------------------------------------
# Module mirroring the PyTorch SymmetricMatrix contract: forward(x) = matvec(x).
# --------------------------------------------------------------------------------------
class SymmetricMatrixPallas:
    """Dense symmetric N x N matrix with a Pallas TPU matvec.

    forward(x) = matvec(x) = x @ M, M symmetric. The compute-dtype copy of M (small
    path) / the packed upper-triangular tile stack (tiled path) are built ONCE at
    construction, never per call.
    """

    def __init__(self, n=None, key=None, *, m=None, compute_dtype=jnp.bfloat16,
                 block=None, num_cores=1, force_tiled=False,
                 small_m_bytes=4 * 1024 * 1024, batch_hint=8):
        if m is None:
            w = jax.random.normal(key, (n, n), dtype=jnp.float32)
            m = 0.5 * (w + w.T)
        else:
            m = jnp.asarray(m, dtype=jnp.float32)
            m = 0.5 * (m + m.T)  # defensive: the tiled path requires M == M.T
        self.m = m
        self.n = int(m.shape[0])
        self.compute_dtype = jnp.dtype(compute_dtype)
        self.num_cores = int(num_cores)  # set 2 on v7x (2 TensorCores per chip)
        # 3-deep M pipeline for <=2-byte streams (bf16), plain double-buffer for f32.
        self._m_buffers = 3 if self.compute_dtype.itemsize <= 2 else 2

        self._use_small = (not force_tiled) and (
            self.n * self.n * self.compute_dtype.itemsize <= small_m_bytes)

        if self._use_small:
            self._m_small = m.astype(self.compute_dtype)     # cached, not per call
            self._tiles = None
        else:
            if block is None:
                block = _pick_block(self.n, batch_hint, self.compute_dtype.itemsize,
                                    self._m_buffers, DEFAULT_VMEM_BUDGET)
            self.block = int(block)
            (self._tiles, self._bi, self._bj,
             self._steps_per_core) = pack_symmetric_tiles(
                m, self.block, self.compute_dtype, self.num_cores,
                assume_symmetric=True)
            self._m_small = None

    def matvec(self, x):
        if self._use_small:
            return symmetric_matvec_small(
                x.astype(self.compute_dtype), self._m_small, x.dtype)
        return symmetric_matvec_tiled(
            x, self._tiles, self._bi, self._bj,
            n=self.n, block=self.block, num_cores=self.num_cores,
            steps_per_core=self._steps_per_core, m_buffers=self._m_buffers,
            out_dtype=x.dtype)

    def __call__(self, x):  # forward(x) = matvec(x)
        return self.matvec(x)

    def __mul__(self, x):   # base class: __mul__ = matvec
        return self.matvec(x)

    # TODO(synk): sqrt()/inv()/mat_add()/mat_sub()/mat_mul() remain abstract in the
    #             PyTorch reference (NotImplementedError); only matvec is implemented.
    # TODO(synk): optional fp8 (v7x) / int8 (v5e/v6e) M-tile storage with per-tile
    #             scales would halve the HBM stream again; not enabled by default.


if __name__ == "__main__":
    key = jax.random.PRNGKey(0)
    k_m, k_x = jax.random.split(key)

    B, N = 8, 256  # small demo shapes; N multiple of 128
    w = jax.random.normal(k_m, (N, N), dtype=jnp.float32)
    m_sym = 0.5 * (w + w.T)
    x = jax.random.normal(k_x, (B, N), dtype=jnp.float32)
    y_ref = jnp.dot(x, m_sym, precision=jax.lax.Precision.HIGHEST)

    # 1) default module: bf16 M/x stream (cached at construction), small fast path
    mod = SymmetricMatrixPallas(m=m_sym)
    y = jax.block_until_ready(mod(x))
    assert y.shape == (B, N) and y.dtype == x.dtype
    assert jnp.allclose(y, y_ref, atol=0.5, rtol=5e-2), "bf16 fast path mismatch"

    # 2) f32 compute, small fast path (tighter tolerance sanity check of the math)
    mod_f32 = SymmetricMatrixPallas(m=m_sym, compute_dtype=jnp.float32)
    y = jax.block_until_ready(mod_f32(x))
    assert jnp.allclose(y, y_ref, atol=1e-2, rtol=1e-3), "f32 fast path mismatch"

    # 3) tiled, symmetry-exploiting path (packed upper-triangular tiles), f32, 1 core
    mod_t32 = SymmetricMatrixPallas(m=m_sym, compute_dtype=jnp.float32,
                                    force_tiled=True, block=128)
    y = jax.block_until_ready(mod_t32(x))
    assert jnp.allclose(y, y_ref, atol=1e-2, rtol=1e-3), "tiled f32 path mismatch"

    # 4) tiled path, bf16 stream, 2-way core-parallel schedule split (v7x layout;
    #    merely sequential but numerically identical on 1-TensorCore chips)
    mod_t16 = SymmetricMatrixPallas(m=m_sym, force_tiled=True, block=128, num_cores=2)
    y = jax.block_until_ready(mod_t16(x))
    assert jnp.allclose(y, y_ref, atol=0.5, rtol=5e-2), "tiled bf16 2-core path mismatch"

    print("KERNEL_OK")
</pallas_src>

<mosaic_0001>
module attributes {stable_mosaic.version = 11 : i64} {
  func.func @_small_matvec_kernel(%arg0: memref<8x256xbf16, #tpu.memory_space<vmem>>, %arg1: memref<256x256xbf16, #tpu.memory_space<vmem>>, %arg2: memref<8x256xf32, #tpu.memory_space<vmem>>) attributes {dimension_semantics = [], scalar_prefetch = 0 : i64, scratch_operands = 0 : i64, tpu.core_type = #tpu.core_type<tc>} {
    %c0 = arith.constant 0 : index
    %c0_0 = arith.constant 0 : index
    %0 = vector.load %arg0[%c0, %c0_0] : memref<8x256xbf16, #tpu.memory_space<vmem>>, vector<8x256xbf16>
    %c0_1 = arith.constant 0 : index
    %c0_2 = arith.constant 0 : index
    %1 = vector.load %arg1[%c0_1, %c0_2] : memref<256x256xbf16, #tpu.memory_space<vmem>>, vector<256x256xbf16>
    %cst = arith.constant dense<0.000000e+00> : vector<8x256xf32>
    %2 = tpu.matmul %0, %1, %cst {dimension_numbers = #tpu.dot_dimension_numbers<[1], [0], [0], [1], [0, 0, 1, 1], [], []>} : vector<8x256xbf16>, vector<256x256xbf16>, vector<8x256xf32> -> vector<8x256xf32>
    %c0_3 = arith.constant 0 : index
    %c0_4 = arith.constant 0 : index
    %3 = vector.load %arg2[%c0_3, %c0_4] : memref<8x256xf32, #tpu.memory_space<vmem>>, vector<8x256xf32>
    tpu.vector_store %arg2[%c0_3, %c0_4], %2 {strides = array<i32>} : memref<8x256xf32, #tpu.memory_space<vmem>>, vector<8x256xf32>,
    return
  }
}

</mosaic_0001>

<llo_original>
// kernel: tpu_custom_call.1
$region0: #{tpu_custom_call.1}
  #allocation0 [shape = 'u32[]', space=smem, size = 0x4, offset = 0x4, fixed_abs, tag = 'smem constant byte address 0x4 - core index']
  #allocation1 [shape = 'u32[144,128]{1,0:T(1,128)}', space=vmem, size = 0x12000, scoped, tag = 'internal scratch']
  %s0 = inlined_call_operand.hbm [shape: bf16[8,256], index: 0, kind: input, shape index: {}]
  %s1 = inlined_call_operand.hbm [shape: bf16[256,256], index: 1, kind: input, shape index: {}]
  %s2 = inlined_call_operand.hbm [shape: f32[8,256], index: 2, kind: output, shape index: {}]
  %s3 = sld [smem:[#allocation0]]
  $region26: #{tpu_custom_call.1} parent=0
    _
  %s5 = ssub.s32 1, %s3
  %s6 = scalar_select 0, %s5, %s3
  $region1: #{tpu_custom_call.1} parent=0
    #allocation2 [shape = 'u8[4096]{0}', space=vmem, size = 0x1000, scoped, tag = 'input window, operand 0, single buffered']
    #allocation3 [shape = 's32[1]{0}', space=sflag, size = 0x4, scoped, tag = 'scoped memory for tpu_custom_call.1']
    #allocation4 [shape = 's32[1]{0}', space=sflag, size = 0x4, scoped, tag = 'scoped memory for tpu_custom_call.1']
    #allocation5 [shape = 'u8[131072]{0}', space=vmem, size = 0x20000, scoped, tag = 'input window, operand 1, single buffered']
    #allocation6 [shape = 's32[1]{0}', space=sflag, size = 0x4, scoped, tag = 'scoped memory for tpu_custom_call.1']
    #allocation7 [shape = 'u8[8192]{0}', space=vmem, size = 0x2000, scoped, tag = 'output window, operand 0, single buffered']
    %7 = vsyncpa [#allocation3], 0
    %8 = vsyncpa [#allocation6], 0
    %9 = vsyncpa [#allocation4], 0
    // Predicated region
    $region2: #{tpu_custom_call.1} parent=1 // pred_check
      _
    $region3: #{tpu_custom_call.1} parent=1 // pred_check_branch
      %11 = sbr.rel (0) target = $region5
    $region4: #{tpu_custom_call.1} parent=1 // pred_region
      %s13 = ssub.s32 128, 128
      %14 = vsyncadd [#allocation3], %s13
      %s16 = sshll.u32 [#allocation2], 4
      %s17 = int_to_ptr.vmem [resolvable:$true] %s16
      %19 = dma.hbm_to_vmem [thread:$0]  %s0, 128, %s17, [#allocation3]
    $region5: #{tpu_custom_call.1} parent=1 // pred_fallthru
      _
    // Predicated region
    $region6: #{tpu_custom_call.1} parent=1 // pred_check
      _
    $region7: #{tpu_custom_call.1} parent=1 // pred_check_branch
      %21 = sbr.rel (0) target = $region9
    $region8: #{tpu_custom_call.1} parent=1 // pred_region
      %s23 = ssub.s32 4096, 4096
      %24 = vsyncadd [#allocation6], %s23
      %s25 = sshll.u32 [#allocation5], 4
      %s26 = int_to_ptr.vmem [resolvable:$true] %s25
      %31 = dma.hbm_to_vmem [thread:$0]  %s1, 4096, %s26, [#allocation6], 128, 128, 8
    $region9: #{tpu_custom_call.1} parent=1 // pred_fallthru
      _
    // Predicated region
    $region10: #{tpu_custom_call.1} parent=1 // pred_check
      _
    $region11: #{tpu_custom_call.1} parent=1 // pred_check_branch
      %33 = sbr.rel (0) target = $region13
    $region12: #{tpu_custom_call.1} parent=1 // pred_region
      %34 = dma.done [#allocation3], 128
    $region13: #{tpu_custom_call.1} parent=1 // pred_fallthru
      _
    // Predicated region
    $region14: #{tpu_custom_call.1} parent=1 // pred_check
      _
    $region15: #{tpu_custom_call.1} parent=1 // pred_check_branch
      %36 = sbr.rel (0) target = $region17
    $region16: #{tpu_custom_call.1} parent=1 // pred_region
      %37 = dma.done [#allocation6], 4096
    $region17: #{tpu_custom_call.1} parent=1 // pred_fallthru
      _
    %v38 = vld [vmem:[#allocation2] sm:$0xff]
    %v39 = vld [vmem:[#allocation5] sm:$0xff]
    %v40 = vld [vmem:[#allocation5 + $0x8] sm:$0xff]
    %v41 = vld [vmem:[#allocation5 + $0x10] sm:$0xff]
    %v42 = vld [vmem:[#allocation5 + $0x18] sm:$0xff]
    %v43 = vld [vmem:[#allocation5 + $0x20] sm:$0xff]
    %v44 = vld [vmem:[#allocation5 + $0x28] sm:$0xff]
    %v45 = vld [vmem:[#allocation5 + $0x30] sm:$0xff]
    %v46 = vld [vmem:[#allocation5 + $0x38] sm:$0xff]
    %v47 = vld [vmem:[#allocation5 + $0x40] sm:$0xff]
    %v48 = vld [vmem:[#allocation5 + $0x48] sm:$0xff]
    %v49 = vld [vmem:[#allocation5 + $0x50] sm:$0xff]
    %v50 = vld [vmem:[#allocation5 + $0x58] sm:$0xff]
    %v51 = vld [vmem:[#allocation5 + $0x60] sm:$0xff]
    %v52 = vld [vmem:[#allocation5 + $0x68] sm:$0xff]
    %v53 = vld [vmem:[#allocation5 + $0x70] sm:$0xff]
    %v54 = vld [vmem:[#allocation5 + $0x78] sm:$0xff]
    %v55 = vld [vmem:[#allocation5 + $0x80] sm:$0xff]
    %v56 = vld [vmem:[#allocation5 + $0x88] sm:$0xff]
    %v57 = vld [vmem:[#allocation5 + $0x90] sm:$0xff]
    %v58 = vld [vmem:[#allocation5 + $0x98] sm:$0xff]
    %v59 = vld [vmem:[#allocation5 + $0xa0] sm:$0xff]
    %v60 = vld [vmem:[#allocation5 + $0xa8] sm:$0xff]
    %v61 = vld [vmem:[#allocation5 + $0xb0] sm:$0xff]
    %v62 = vld [vmem:[#allocation5 + $0xb8] sm:$0xff]
    %v63 = vld [vmem:[#allocation5 + $0xc0] sm:$0xff]
    %v64 = vld [vmem:[#allocation5 + $0xc8] sm:$0xff]
    %v65 = vld [vmem:[#allocation5 + $0xd0] sm:$0xff]
    %v66 = vld [vmem:[#allocation5 + $0xd8] sm:$0xff]
    %v67 = vld [vmem:[#allocation5 + $0xe0] sm:$0xff]
    %v68 = vld [vmem:[#allocation5 + $0xe8] sm:$0xff]
    %v69 = vld [vmem:[#allocation5 + $0xf0] sm:$0xff]
    %v70 = vld [vmem:[#allocation5 + $0xf8] sm:$0xff]
    %v72 = vunpack.c.l.b16 %v38
    %v73 = vunpack.c.h.b16 %v38
    %v74 = vpack.c.b16 %v72, %v72
    %v75 = vpack.c.b16 %v73, %v73
    %v110 = vunpack.c.l.b16 %v39
    %v111 = vunpack.c.h.b16 %v39
    %v112 = vunpack.c.l.b16 %v40
    %v113 = vunpack.c.h.b16 %v40
    %v114 = vunpack.c.l.b16 %v41
    %v115 = vunpack.c.h.b16 %v41
    %v116 = vunpack.c.l.b16 %v42
    %v117 = vunpack.c.h.b16 %v42
    %v118 = vunpack.c.l.b16 %v43
    %v119 = vunpack.c.h.b16 %v43
    %v120 = vunpack.c.l.b16 %v44
    %v121 = vunpack.c.h.b16 %v44
    %v122 = vunpack.c.l.b16 %v45
    %v123 = vunpack.c.h.b16 %v45
    %v124 = vunpack.c.l.b16 %v46
    %v125 = vunpack.c.h.b16 %v46
    %v126 = vunpack.c.l.b16 %v47
    %v127 = vunpack.c.h.b16 %v47
    %v128 = vunpack.c.l.b16 %v48
    %v129 = vunpack.c.h.b16 %v48
    %v130 = vunpack.c.l.b16 %v49
    %v131 = vunpack.c.h.b16 %v49
    %v132 = vunpack.c.l.b16 %v50
    %v133 = vunpack.c.h.b16 %v50
    %v134 = vunpack.c.l.b16 %v51
    %v135 = vunpack.c.h.b16 %v51
    %v136 = vunpack.c.l.b16 %v52
    %v137 = vunpack.c.h.b16 %v52
    %v138 = vunpack.c.l.b16 %v53
    %v139 = vunpack.c.h.b16 %v53
    %v140 = vunpack.c.l.b16 %v54
    %v141 = vunpack.c.h.b16 %v54
    %v142 = vunpack.c.l.b16 %v55
    %v143 = vunpack.c.h.b16 %v55
    %v144 = vunpack.c.l.b16 %v56
    %v145 = vunpack.c.h.b16 %v56
    %v146 = vunpack.c.l.b16 %v57
    %v147 = vunpack.c.h.b16 %v57
    %v148 = vunpack.c.l.b16 %v58
    %v149 = vunpack.c.h.b16 %v58
    %v150 = vunpack.c.l.b16 %v59
    %v151 = vunpack.c.h.b16 %v59
    %v152 = vunpack.c.l.b16 %v60
    %v153 = vunpack.c.h.b16 %v60
    %v154 = vunpack.c.l.b16 %v61
    %v155 = vunpack.c.h.b16 %v61
    %v156 = vunpack.c.l.b16 %v62
    %v157 = vunpack.c.h.b16 %v62
    %v158 = vunpack.c.l.b16 %v63
    %v159 = vunpack.c.h.b16 %v63
    %v160 = vunpack.c.l.b16 %v64
    %v161 = vunpack.c.h.b16 %v64
    %v162 = vunpack.c.l.b16 %v65
    %v163 = vunpack.c.h.b16 %v65
    %v164 = vunpack.c.l.b16 %v66
    %v165 = vunpack.c.h.b16 %v66
    %v166 = vunpack.c.l.b16 %v67
    %v167 = vunpack.c.h.b16 %v67
    %v168 = vunpack.c.l.b16 %v68
    %v169 = vunpack.c.h.b16 %v68
    %v170 = vunpack.c.l.b16 %v69
    %v171 = vunpack.c.h.b16 %v69
    %v172 = vunpack.c.l.b16 %v70
    %v173 = vunpack.c.h.b16 %v70
    %v174 = vpack.c.b16 %v112, %v110
    %v175 = vpack.c.b16 %v113, %v111
    %v176 = vpack.c.b16 %v116, %v114
    %v177 = vpack.c.b16 %v117, %v115
    %v178 = vpack.c.b16 %v120, %v118
    %v179 = vpack.c.b16 %v121, %v119
    %v180 = vpack.c.b16 %v124, %v122
    %v181 = vpack.c.b16 %v125, %v123
    %v182 = vpack.c.b16 %v128, %v126
    %v183 = vpack.c.b16 %v129, %v127
    %v184 = vpack.c.b16 %v132, %v130
    %v185 = vpack.c.b16 %v133, %v131
    %v186 = vpack.c.b16 %v136, %v134
    %v187 = vpack.c.b16 %v137, %v135
    %v188 = vpack.c.b16 %v140, %v138
    %v189 = vpack.c.b16 %v141, %v139
    %v190 = vpack.c.b16 %v144, %v142
    %v191 = vpack.c.b16 %v145, %v143
    %v192 = vpack.c.b16 %v148, %v146
    %v193 = vpack.c.b16 %v149, %v147
    %v194 = vpack.c.b16 %v152, %v150
    %v195 = vpack.c.b16 %v153, %v151
    %v196 = vpack.c.b16 %v156, %v154
    %v197 = vpack.c.b16 %v157, %v155
    %v198 = vpack.c.b16 %v160, %v158
    %v199 = vpack.c.b16 %v161, %v159
    %v200 = vpack.c.b16 %v164, %v162
    %v201 = vpack.c.b16 %v165, %v163
    %v202 = vpack.c.b16 %v168, %v166
    %v203 = vpack.c.b16 %v169, %v167
    %v204 = vpack.c.b16 %v172, %v170
    %v205 = vpack.c.b16 %v173, %v171
    %238 = vmatprep.subr.bf16.mxu0 %v175
    %239 = vmatpush1.bf16.msra.mxu0 %v174
    %240 = vmatprep.subr.bf16.mxu0 %v177
    %241 = vmatpush1.bf16.msra.mxu0 %v176
    %242 = vmatprep.subr.bf16.mxu0 %v179
    %243 = vmatpush1.bf16.msra.mxu0 %v178
    %244 = vmatprep.subr.bf16.mxu0 %v181
    %245 = vmatpush1.bf16.msra.mxu0 %v180
    %246 = vmatprep.subr.bf16.mxu0 %v183
    %247 = vmatpush1.bf16.msra.mxu0 %v182
    %248 = vmatprep.subr.bf16.mxu0 %v185
    %249 = vmatpush1.bf16.msra.mxu0 %v184
    %250 = vmatprep.subr.bf16.mxu0 %v187
    %251 = vmatpush1.bf16.msra.mxu0 %v186
    %252 = vmatprep.subr.bf16.mxu0 %v189
    %253 = vmatpush1.bf16.msra.mxu0 %v188
    %254 = vmatprep.subr.bf16.mxu0 %v191
    %255 = vmatpush1.bf16.msra.mxu0 %v190
    %256 = vmatprep.subr.bf16.mxu0 %v193
    %257 = vmatpush1.bf16.msra.mxu0 %v192
    %258 = vmatprep.subr.bf16.mxu0 %v195
    %259 = vmatpush1.bf16.msra.mxu0 %v194
    %260 = vmatprep.subr.bf16.mxu0 %v197
    %261 = vmatpush1.bf16.msra.mxu0 %v196
    %262 = vmatprep.subr.bf16.mxu0 %v199
    %263 = vmatpush1.bf16.msra.mxu0 %v198
    %264 = vmatprep.subr.bf16.mxu0 %v201
    %265 = vmatpush1.bf16.msra.mxu0 %v200
    %266 = vmatprep.subr.bf16.mxu0 %v203
    %267 = vmatpush1.bf16.msra.mxu0 %v202
    %268 = vmatprep.subr.bf16.mxu0 %v205
    %269 = vmatpush1.bf16.msra.mxu0 %v204
    %270 = vmatprep.mubr.bf16.mxu0 %v75
    %271 = vmatmul.mubr.bf16.gmra.mrb[0].mxu0 %v74
    %v272 = vpop.f32.mrb[0].mxu0
    %v273 = vadd.f32 0.0, %v272
    %v274 = vpop.f32.mrb[0].mxu0
    %v275 = vadd.f32 0.0, %v274
    %v276 = vpop.f32.mrb[0].mxu0
    %v277 = vpop.f32.mrb[0].mxu0
    %278 = vdwg.mxu0
    %279 = vst [vmem:[#allocation7] sm:$0xff] %v273
    %280 = vst [vmem:[#allocation7 + $0x8] sm:$0xff] %v275
    // Predicated region
    $region18: #{tpu_custom_call.1} parent=1 // pred_check
      _
    $region19: #{tpu_custom_call.1} parent=1 // pred_check_branch
      %282 = sbr.rel (0) target = $region21
    $region20: #{tpu_custom_call.1} parent=1 // pred_region
      %s284 = ssub.s32 256, 256
      %285 = vsyncadd [#allocation4], %s284
      %s287 = sshll.u32 [#allocation7], 4
      %s288 = int_to_ptr.vmem [resolvable:$true] %s287
      %290 = dma.vmem_to_hbm [thread:$0]  %s288, 256, %s2, [#allocation4]
    $region21: #{tpu_custom_call.1} parent=1 // pred_fallthru
      _
    // Predicated region
    $region22: #{tpu_custom_call.1} parent=1 // pred_check
      _
    $region23: #{tpu_custom_call.1} parent=1 // pred_check_branch
      %292 = sbr.rel (0) target = $region25
    $region24: #{tpu_custom_call.1} parent=1 // pred_region
      %293 = dma.done [#allocation4], 256
    $region25: #{tpu_custom_call.1} parent=1 // pred_fallthru
      _
    %294 = vsyncpa [#allocation3], 1
    %295 = vsyncpa [#allocation6], 1
    %296 = vsyncpa [#allocation4], 1

</llo_original>
